<compile_context>
chip_gen: v6e
topology: v6e:2x2x1
jax: 0.10.0
libtpu: 0.0.40
codegen_flags: <defaults>
</compile_context>

<pallas_src>
import jax
import jax.numpy as jnp
from jax.experimental import pallas as pl
from jax.experimental.pallas import tpu as pltpu


def _round_up(x, m):
    return ((x + m - 1) // m) * m


def _make_kernel(kh, kw, tile_h, w_in, w_out):
    """Build the per-call kernel (all tiling constants are Python ints)."""
    halo_rows = tile_h + kh - 1

    def kernel(w_ref, b_ref, x_hbm, o_ref, xbuf, sem):
        # w_ref : SMEM (kh, kw)      -- kernel weights, read as scalars
        # b_ref : SMEM (1,)          -- scalar bias
        # x_hbm : HBM  (H_in, w_in)  -- padded input, manual DMA only
        # o_ref : VMEM (tile_h, w_out) -- lane-dense output tile (auto pipeline)
        # xbuf  : VMEM (2, halo_rows, w_in) -- double-buffered halo'd input rows
        # sem   : DMA semaphores (2,)
        i = pl.program_id(0)
        n = pl.num_programs(0)
        cur = i & 1

        def copy_desc(tile_idx, slot):
            start = pl.multiple_of(tile_idx * tile_h, 8)
            return pltpu.make_async_copy(
                x_hbm.at[pl.ds(start, halo_rows)],
                xbuf.at[slot],
                sem.at[slot],
            )

        # Prime the pipeline on the first grid step.
        @pl.when(i == 0)
        def _():
            copy_desc(0, 0).start()

        # Prefetch next tile's halo'd window into the other slot.
        @pl.when(i + 1 < n)
        def _():
            copy_desc(i + 1, 1 - cur).start()

        # Wait for this tile's input window.
        copy_desc(i, cur).wait()

        bias = b_ref[0].astype(jnp.float32)
        acc = jnp.zeros((tile_h, w_out), jnp.float32)
        # kh, kw are tiny and static -> fully unrolled shifted multiply-adds.
        for di in range(kh):
            if kw == 1:
                win = xbuf[cur, pl.ds(di, tile_h), pl.ds(0, w_out)]
                acc = acc + w_ref[di, 0].astype(jnp.float32) * win.astype(jnp.float32)
            else:
                # One aligned full-width load per row tap; column shifts go to
                # the XLU via roll (separate VLIW slot from the VPU MACs).
                row = xbuf[cur, pl.ds(di, tile_h), :].astype(jnp.float32)
                for dj in range(kw):
                    if dj == 0:
                        win = row[:, :w_out]
                    else:
                        win = pltpu.roll(row, w_in - dj, axis=1)[:, :w_out]
                    acc = acc + w_ref[di, dj].astype(jnp.float32) * win
        o_ref[...] = (acc + bias).astype(o_ref.dtype)

    return kernel


def conv2d_forward(x, weight, bias, *, tile_h=256,
                   vmem_budget_bytes=48 * 1024 * 1024):
    """Pallas equivalent of Conv2D.forward: corr2d(x, weight) + bias."""
    x = jnp.asarray(x)
    weight = jnp.asarray(weight)
    bias = jnp.asarray(bias).reshape((1,))

    H, W = x.shape
    kh, kw = weight.shape
    h_out, w_out = H - kh + 1, W - kw + 1
    assert h_out >= 1 and w_out >= 1

    itemsize = x.dtype.itemsize

    # Lane-dense output width (multiple of 128) -> unmasked vector stores.
    w_out_pad = _round_up(w_out, 128)
    # Input block width must also cover the (kw - 1) column halo, lane aligned.
    w_in_pad = _round_up(w_out_pad + kw - 1, 128)

    # Row tile: multiple of 8 sublanes; shrink until the double-buffered
    # working set (2x halo'd input tile + 2x output tile) fits the budget.
    th = min(int(tile_h), _round_up(h_out, 8))
    th = max(8, (th // 8) * 8)

    def vmem_need(t):
        xbuf = 2 * (t + kh - 1) * w_in_pad * itemsize
        obuf = 2 * t * w_out_pad * itemsize
        return xbuf + obuf

    while th > 8 and vmem_need(th) > vmem_budget_bytes:
        th = max(8, (th // 2 // 8) * 8)

    h_out_pad = _round_up(h_out, th)
    n_tiles = h_out_pad // th
    h_in_pad = h_out_pad + kh - 1  # rows needed to produce h_out_pad output rows

    # Zero-pad the input once; padded rows/cols only feed output positions
    # that are sliced off below.
    x_pad = jnp.zeros((h_in_pad, w_in_pad), x.dtype).at[:H, :W].set(x)

    kernel = _make_kernel(kh, kw, th, w_in_pad, w_out_pad)

    grid_spec = pltpu.PrefetchScalarGridSpec(
        num_scalar_prefetch=0,
        grid=(n_tiles,),
        in_specs=[
            pl.BlockSpec(memory_space=pltpu.MemorySpace.SMEM),  # weight
            pl.BlockSpec(memory_space=pltpu.MemorySpace.SMEM),  # bias
            pl.BlockSpec(memory_space=pl.ANY),                  # x stays in HBM
        ],
        out_specs=pl.BlockSpec((th, w_out_pad), lambda i: (i, 0)),
        scratch_shapes=[
            pltpu.VMEM((2, th + kh - 1, w_in_pad), x.dtype),
            pltpu.SemaphoreType.DMA((2,)),
        ],
    )

    vmem_limit = int(min(max(vmem_need(th) + (8 << 20), 32 << 20), 64 << 20))

    y_pad = pl.pallas_call(
        kernel,
        out_shape=jax.ShapeDtypeStruct((h_out_pad, w_out_pad), x.dtype),
        grid_spec=grid_spec,
        compiler_params=pltpu.CompilerParams(
            dimension_semantics=("arbitrary",),
            vmem_limit_bytes=vmem_limit,
        ),
        cost_estimate=pl.CostEstimate(
            flops=2 * kh * kw * h_out * w_out,
            transcendentals=0,
            bytes_accessed=(H * W + h_out * w_out) * itemsize,
        ),
    )(weight, bias, x_pad)

    # Slice off the alignment padding (no-op when already aligned).
    return y_pad[:h_out, :w_out]


def corr2d_ref(x, k):
    """Plain-JAX reference mirroring the PyTorch corr2d loop."""
    kh, kw = k.shape
    h_out, w_out = x.shape[0] - kh + 1, x.shape[1] - kw + 1
    out = jnp.zeros((h_out, w_out), jnp.float32)
    for di in range(kh):
        for dj in range(kw):
            out = out + k[di, dj] * x[di:di + h_out, dj:dj + w_out]
    return out


if __name__ == "__main__":
    key = jax.random.PRNGKey(0)
    k_w, k_x = jax.random.split(key)

    # --- Case 1: the chapter's setup: X (6, 8) edge image, K = [[1, -1]] ---
    X = jnp.ones((6, 8), jnp.float32).at[:, 2:6].set(0.0)
    K = jnp.array([[1.0, -1.0]], jnp.float32)
    b0 = jnp.zeros((1,), jnp.float32)

    y1 = jax.block_until_ready(conv2d_forward(X, K, b0))
    ref1 = corr2d_ref(X, K) + b0[0]
    assert y1.shape == (6, 7)
    assert jnp.allclose(y1, ref1, atol=1e-5, rtol=1e-5)

    # --- Case 2: Conv2D module init (random weight, zero bias), multi-tile grid ---
    H, W = 64, 40
    kernel_size = (2, 2)
    x = jax.random.uniform(k_x, (H, W), dtype=jnp.float32)
    weight = jax.random.uniform(k_w, kernel_size, dtype=jnp.float32)
    bias = jnp.zeros((1,), jnp.float32)

    y2 = jax.block_until_ready(conv2d_forward(x, weight, bias, tile_h=16))
    ref2 = corr2d_ref(x, weight) + bias[0]
    assert y2.shape == (H - kernel_size[0] + 1, W - kernel_size[1] + 1)
    assert jnp.allclose(y2, ref2, atol=1e-4, rtol=1e-4)

    print("KERNEL_OK")
</pallas_src>

<mosaic_0001>
module attributes {stable_mosaic.version = 11 : i64} {
  func.func @kernel(%arg0: i32, %arg1: memref<1x2xf32, #tpu.memory_space<smem>>, %arg2: memref<1xf32, #tpu.memory_space<smem>>, %arg3: memref<8x256xf32, #tpu.memory_space<any>>, %arg4: memref<8x128xf32, #tpu.memory_space<vmem>>, %arg5: memref<2x8x256xf32, #tpu.memory_space<vmem>>, %arg6: memref<2x!tpu.dma_semaphore, #tpu.memory_space<semaphore_mem>>) attributes {dimension_semantics = [#tpu.dimension_semantics<arbitrary>], iteration_bounds = array<i64: 1>, scalar_prefetch = 0 : i64, scratch_operands = 2 : i64, tpu.core_type = #tpu.core_type<tc>, window_params = [{transform_indices = @transform_0, window_bounds = array<i64: 1, 2>}, {transform_indices = @transform_1, window_bounds = array<i64: 1>}, {}, {transform_indices = @transform_3, window_bounds = array<i64: 8, 128>}]} {
    %c1_i32 = arith.constant 1 : i32
    %0 = arith.andi %arg0, %c1_i32 : i32
    %c0_i32 = arith.constant 0 : i32
    %1 = arith.cmpi eq, %arg0, %c0_i32 : i32
    %2 = arith.extui %1 : i1 to i32
    %c0_i32_0 = arith.constant 0 : i32
    %3 = arith.cmpi ne, %2, %c0_i32_0 : i32
    scf.if %3 {
      %c0_i32_14 = arith.constant 0 : i32
      %34 = tpu.assume_multiple %c0_i32_14, 8 : i32
      %c0_i32_15 = arith.constant 0 : i32
      %c0_i32_16 = arith.constant 0 : i32
      %c0_i32_17 = arith.constant 0 : i32
      %35 = tpu.memref_slice %arg3[%34, %c0_i32_17] : memref<8x256xf32, #tpu.memory_space<any>> -> memref<8x256xf32, #tpu.memory_space<any>>
      %c0_i32_18 = arith.constant 0 : i32
      %c0_i32_19 = arith.constant 0 : i32
      %36 = tpu.memref_slice %arg5[%c0_i32_15, %c0_i32_18, %c0_i32_19] : memref<2x8x256xf32, #tpu.memory_space<vmem>> -> memref<1x8x256xf32, #tpu.memory_space<vmem>>
      %37 = tpu.memref_squeeze %36 : memref<1x8x256xf32, #tpu.memory_space<vmem>> -> memref<8x256xf32, #tpu.memory_space<vmem>>
      %38 = tpu.memref_slice %arg6[%c0_i32_16] : memref<2x!tpu.dma_semaphore, #tpu.memory_space<semaphore_mem>> -> memref<1x!tpu.dma_semaphore, #tpu.memory_space<semaphore_mem>>
      %39 = tpu.memref_squeeze %38 : memref<1x!tpu.dma_semaphore, #tpu.memory_space<semaphore_mem>> -> memref<!tpu.dma_semaphore, #tpu.memory_space<semaphore_mem>>
      tpu.enqueue_dma source(%35 : memref<8x256xf32, #tpu.memory_space<any>>) target(%37 : memref<8x256xf32, #tpu.memory_space<vmem>>) target_semaphore(%39 : memref<!tpu.dma_semaphore, #tpu.memory_space<semaphore_mem>>)
    } else {
    }
    %c1_i32_1 = arith.constant 1 : i32
    %4 = arith.addi %arg0, %c1_i32_1 : i32
    %c1_i32_2 = arith.constant 1 : i32
    %5 = arith.cmpi slt, %4, %c1_i32_2 : i32
    %6 = arith.extui %5 : i1 to i32
    %c0_i32_3 = arith.constant 0 : i32
    %7 = arith.cmpi ne, %6, %c0_i32_3 : i32
    scf.if %7 {
      %c1_i32_14 = arith.constant 1 : i32
      %34 = arith.addi %arg0, %c1_i32_14 : i32
      %c1_i32_15 = arith.constant 1 : i32
      %35 = arith.subi %c1_i32_15, %0 : i32
      %c8_i32_16 = arith.constant 8 : i32
      %36 = arith.muli %34, %c8_i32_16 : i32
      %37 = tpu.assume_multiple %36, 8 : i32
      %c0_i32_17 = arith.constant 0 : i32
      %38 = tpu.memref_slice %arg3[%37, %c0_i32_17] : memref<8x256xf32, #tpu.memory_space<any>> -> memref<8x256xf32, #tpu.memory_space<any>>
      %c0_i32_18 = arith.constant 0 : i32
      %c0_i32_19 = arith.constant 0 : i32
      %39 = tpu.memref_slice %arg5[%35, %c0_i32_18, %c0_i32_19] : memref<2x8x256xf32, #tpu.memory_space<vmem>> -> memref<1x8x256xf32, #tpu.memory_space<vmem>>
      %40 = tpu.memref_squeeze %39 : memref<1x8x256xf32, #tpu.memory_space<vmem>> -> memref<8x256xf32, #tpu.memory_space<vmem>>
      %41 = tpu.memref_slice %arg6[%35] : memref<2x!tpu.dma_semaphore, #tpu.memory_space<semaphore_mem>> -> memref<1x!tpu.dma_semaphore, #tpu.memory_space<semaphore_mem>>
      %42 = tpu.memref_squeeze %41 : memref<1x!tpu.dma_semaphore, #tpu.memory_space<semaphore_mem>> -> memref<!tpu.dma_semaphore, #tpu.memory_space<semaphore_mem>>
      tpu.enqueue_dma source(%38 : memref<8x256xf32, #tpu.memory_space<any>>) target(%40 : memref<8x256xf32, #tpu.memory_space<vmem>>) target_semaphore(%42 : memref<!tpu.dma_semaphore, #tpu.memory_space<semaphore_mem>>)
    } else {
    }
    %c8_i32 = arith.constant 8 : i32
    %8 = arith.muli %arg0, %c8_i32 : i32
    %9 = tpu.assume_multiple %8, 8 : i32
    %c0_i32_4 = arith.constant 0 : i32
    %10 = tpu.memref_slice %arg3[%9, %c0_i32_4] : memref<8x256xf32, #tpu.memory_space<any>> -> memref<8x256xf32, #tpu.memory_space<any>>
    %c0_i32_5 = arith.constant 0 : i32
    %c0_i32_6 = arith.constant 0 : i32
    %11 = tpu.memref_slice %arg5[%0, %c0_i32_5, %c0_i32_6] : memref<2x8x256xf32, #tpu.memory_space<vmem>> -> memref<1x8x256xf32, #tpu.memory_space<vmem>>
    %12 = tpu.memref_squeeze %11 : memref<1x8x256xf32, #tpu.memory_space<vmem>> -> memref<8x256xf32, #tpu.memory_space<vmem>>
    %13 = tpu.memref_slice %arg6[%0] : memref<2x!tpu.dma_semaphore, #tpu.memory_space<semaphore_mem>> -> memref<1x!tpu.dma_semaphore, #tpu.memory_space<semaphore_mem>>
    %14 = tpu.memref_squeeze %13 : memref<1x!tpu.dma_semaphore, #tpu.memory_space<semaphore_mem>> -> memref<!tpu.dma_semaphore, #tpu.memory_space<semaphore_mem>>
    tpu.wait_dma2 semaphore(%14 : memref<!tpu.dma_semaphore, #tpu.memory_space<semaphore_mem>>) src(%10 : memref<8x256xf32, #tpu.memory_space<any>>) dst(%12 : memref<8x256xf32, #tpu.memory_space<vmem>>)
    %c0 = arith.constant 0 : index
    %15 = memref.load %arg2[%c0] : memref<1xf32, #tpu.memory_space<smem>>
    %cst = arith.constant 0.000000e+00 : f32
    %16 = vector.broadcast %cst : f32 to vector<8x128xf32>
    %17 = arith.index_cast %0 : i32 to index
    %c0_7 = arith.constant 0 : index
    %c0_8 = arith.constant 0 : index
    %18 = vector.load %arg5[%17, %c0_7, %c0_8] : memref<2x8x256xf32, #tpu.memory_space<vmem>>, vector<1x8x256xf32>
    %19 = vector.shape_cast %18 : vector<1x8x256xf32> to vector<8x256xf32>
    %20 = vector.extract_strided_slice %19 {offsets = [0, 0], sizes = [8, 128], strides = [1, 1]} : vector<8x256xf32> to vector<8x128xf32>
    %c0_9 = arith.constant 0 : index
    %c0_10 = arith.constant 0 : index
    %21 = memref.load %arg1[%c0_9, %c0_10] : memref<1x2xf32, #tpu.memory_space<smem>>
    %22 = vector.broadcast %21 : f32 to vector<8x128xf32>
    %23 = arith.mulf %22, %20 : vector<8x128xf32>
    %24 = arith.addf %16, %23 : vector<8x128xf32>
    %c255_i32 = arith.constant 255 : i32
    %25 = tpu.dynamic_rotate %19 by %c255_i32 dim 1 : vector<8x256xf32>, i32 -> vector<8x256xf32>
    %26 = vector.extract_strided_slice %25 {offsets = [0, 0], sizes = [8, 128], strides = [1, 1]} : vector<8x256xf32> to vector<8x128xf32>
    %c0_11 = arith.constant 0 : index
    %c1 = arith.constant 1 : index
    %27 = memref.load %arg1[%c0_11, %c1] : memref<1x2xf32, #tpu.memory_space<smem>>
    %28 = vector.broadcast %27 : f32 to vector<8x128xf32>
    %29 = arith.mulf %28, %26 : vector<8x128xf32>
    %30 = arith.addf %24, %29 : vector<8x128xf32>
    %31 = vector.broadcast %15 : f32 to vector<8x128xf32>
    %32 = arith.addf %30, %31 : vector<8x128xf32>
    %c0_12 = arith.constant 0 : index
    %c0_13 = arith.constant 0 : index
    %33 = vector.load %arg4[%c0_12, %c0_13] : memref<8x128xf32, #tpu.memory_space<vmem>>, vector<8x128xf32>
    tpu.vector_store %arg4[%c0_12, %c0_13], %32 {strides = array<i32>} : memref<8x128xf32, #tpu.memory_space<vmem>>, vector<8x128xf32>,
    return
  }
  func.func @transform_0(%arg0: i32) -> (i32, i32) {
    %c0_i32 = arith.constant 0 : i32
    %c0_i32_0 = arith.constant 0 : i32
    %c0_i32_1 = arith.constant 0 : i32
    return %c0_i32, %c0_i32_0 : i32, i32
  }
  func.func @transform_1(%arg0: i32) -> i32 {
    %c0_i32 = arith.constant 0 : i32
    %c0_i32_0 = arith.constant 0 : i32
    return %c0_i32 : i32
  }
  func.func @transform_3(%arg0: i32) -> (i32, i32) {
    %c0_i32 = arith.constant 0 : i32
    %c0_i32_0 = arith.constant 0 : i32
    return %arg0, %c0_i32 : i32, i32
  }
}

</mosaic_0001>

<llo_original>
// kernel: tpu_custom_call.1
$region0: #{tpu_custom_call.1}
  #allocation0 [shape = 'u32[]', space=smem, size = 0x4, offset = 0x4, fixed_abs, tag = 'smem constant byte address 0x4 - core index']
  #allocation1 [shape = 'u32[144,128]{1,0:T(1,128)}', space=vmem, size = 0x12000, scoped, tag = 'internal scratch']
  #allocation2 [shape = 'f32[2,8,256]{2,1,0:T(8,128)}', space=vmem, size = 0x4000, scoped, tag = 'scratch operand']
  #allocation3 [shape = 's32[2]{0}', space=sflag, size = 0x8, scoped, tag = 'scratch operand']
  #allocation4 [shape = 'f32[1]{0:T(128)S(6)}', space=smem, size = 0x200, scoped, tag = 'scoped memory for tpu_custom_call.1']
  #allocation9 [shape = 's32[]', space=sflag, size = 0x4, offset = 0, fixed_abs, tag = 'sflag constant byte address 0x0 - dummy sync flag']
  #allocation10 [shape = 's32[]', space=sflag, size = 0x4, offset = 0, fixed_abs, tag = 'sflag constant byte address 0x0 - dummy sync flag']
  #allocation11 [shape = 'u32[]', space=smem, size = 0x4, offset = 0x44, fixed_abs, tag = 'smem constant byte address 0x44 - assertion arg 0']
  #allocation12 [shape = 'u32[]', space=smem, size = 0x4, offset = 0x48, fixed_abs, tag = 'smem constant byte address 0x48 - assertion arg 1']
  #allocation13 [shape = 's32[]', space=sflag, size = 0x4, offset = 0, fixed_abs, tag = 'sflag constant byte address 0x0 - dummy sync flag']
  #allocation14 [shape = 's32[]', space=sflag, size = 0x4, offset = 0, fixed_abs, tag = 'sflag constant byte address 0x0 - dummy sync flag']
  %s0 = inlined_call_operand.vmem [shape: f32[1,2], index: 0, kind: input, shape index: {}]
  %s1 = inlined_call_operand.<no memory space> [shape: f32[1], index: 1, kind: input, shape index: {}]
  %s2 = inlined_call_operand.hbm [shape: f32[8,256], index: 2, kind: input, shape index: {}]
  %s3 = inlined_call_operand.hbm [shape: f32[8,128], index: 3, kind: output, shape index: {}]
  %s4 = sld [smem:[#allocation0]]
  $region38: #{tpu_custom_call.1} parent=0
    _
  %s6 = ssub.s32 1, %s4
  %s7 = scalar_select 0, %s6, %s4
  %8 = sst [smem:[#allocation4]] %s1
  $region1: #{tpu_custom_call.1} parent=0
    #allocation5 [shape = 'u8[512]{0}', space=smem, size = 0x200, scoped, tag = 'input window, operand 0, single buffered']
    #allocation6 [shape = 's32[1]{0}', space=sflag, size = 0x4, scoped, tag = 'scoped memory for tpu_custom_call.1']
    #allocation7 [shape = 's32[1]{0}', space=sflag, size = 0x4, scoped, tag = 'scoped memory for tpu_custom_call.1']
    #allocation8 [shape = 'u8[4096]{0}', space=vmem, size = 0x1000, scoped, tag = 'output window, operand 0, single buffered']
    %9 = vsyncpa [#allocation7], 0
    %10 = vsyncpa [#allocation6], 0
    // Predicated region
    $region2: #{tpu_custom_call.1} parent=1 // pred_check
      _
    $region3: #{tpu_custom_call.1} parent=1 // pred_check_branch
      %12 = sbr.rel (0) target = $region5
    $region4: #{tpu_custom_call.1} parent=1 // pred_region
      %s14 = ssub.s32 16, 16
      %15 = vsyncadd [#allocation7], %s14
      %s17 = sshll.u32 %s0, 4
      %s18 = int_to_ptr.vmem [resolvable:$true] %s17
      %20 = dma.vmem_to_smem %s18, 16, [#allocation5], [#allocation7]
    $region5: #{tpu_custom_call.1} parent=1 // pred_fallthru
      _
    // Predicated region
    $region6: #{tpu_custom_call.1} parent=1 // pred_check
      _
    $region7: #{tpu_custom_call.1} parent=1 // pred_check_branch
      %22 = sbr.rel (0) target = $region9
    $region8: #{tpu_custom_call.1} parent=1 // pred_region
      _
    $region9: #{tpu_custom_call.1} parent=1 // pred_fallthru
      _
    // Predicated region
    $region10: #{tpu_custom_call.1} parent=1 // pred_check
      _
    $region11: #{tpu_custom_call.1} parent=1 // pred_check_branch
      %24 = sbr.rel (0) target = $region13
    $region12: #{tpu_custom_call.1} parent=1 // pred_region
      %25 = dma.done [#allocation7], 16
    $region13: #{tpu_custom_call.1} parent=1 // pred_fallthru
      _
    %26 = sfence
    %s27 = sand.u32 0, 1
    %p28 = scmp.eq.s32.totalorder 0, 0
    // Predicated region
    $region14: #{tpu_custom_call.1} parent=1 // pred_check
      %p29 = pneg %p28
    $region15: #{tpu_custom_call.1} parent=1 // pred_check_branch
      %31 = sbr.rel (%p29) target = $region17
    $region16: #{tpu_custom_call.1} parent=1 // pred_region
      %s32 = smul.u32 0, 2
      %s33 = smul.addr %s32, 128
      %s34 = scalar_lea.hbm %s2, %s33
      // Predicated region
      $region18: #{tpu_custom_call.1} parent=16 // pred_check
        _
      $region19: #{tpu_custom_call.1} parent=16 // pred_check_branch
        %36 = sbr.rel target = $region21
      $region20: #{tpu_custom_call.1} parent=16 // pred_region
        %37 = sst [smem:[#allocation11]] [#allocation10]
        %38 = sst [smem:[#allocation12]] [#allocation9]
      $region21: #{tpu_custom_call.1} parent=16 // pred_fallthru
        _
      %40 = shalt.err (0)
      %s42 = sshll.u32 [#allocation2], 4
      %s43 = int_to_ptr.vmem [resolvable:$true] %s42
      %45 = dma.hbm_to_vmem [thread:$0]  %s34, 256, %s43, [#allocation3]
    $region17: #{tpu_custom_call.1} parent=1 // pred_fallthru
      _
    %s46 = sadd.s32 0, 1
    %p47 = scmp.lt.s32.totalorder %s46, 1
    // Predicated region
    $region22: #{tpu_custom_call.1} parent=1 // pred_check
      %p48 = pneg %p47
    $region23: #{tpu_custom_call.1} parent=1 // pred_check_branch
      %50 = sbr.rel (%p48) target = $region25
    $region24: #{tpu_custom_call.1} parent=1 // pred_region
      %s51 = ssub.s32 1, %s27
      %s52 = smul.u32 %s46, 8
      %s53 = sshra.s32 %s52, 3
      %s54 = sand.u32 %s52, 7
      %s55 = smul.u32 %s53, 2
      %s56 = smul.addr %s55, 128
      %s57 = scalar_lea.hbm %s2, %s56
      %s58 = smul.u32 %s51, 2
      %s59 = smul.addr %s58, 8
      %s60 = scalar_lea.vmem [#allocation2], %s59
      %s61 = scalar_lea.sflag [#allocation3], %s51
      // Predicated region
      $region26: #{tpu_custom_call.1} parent=24 // pred_check
        _
      $region27: #{tpu_custom_call.1} parent=24 // pred_check_branch
        %63 = sbr.rel target = $region29
      $region28: #{tpu_custom_call.1} parent=24 // pred_region
        %64 = sst [smem:[#allocation11]] [#allocation14]
        %65 = sst [smem:[#allocation12]] [#allocation13]
      $region29: #{tpu_custom_call.1} parent=24 // pred_fallthru
        _
      %67 = shalt.err (0)
      %s69 = sshll.u32 %s60, 4
      %s70 = int_to_ptr.vmem [resolvable:$true] %s69
      %72 = dma.hbm_to_vmem [thread:$0]  %s57, 256, %s70, %s61
    $region25: #{tpu_custom_call.1} parent=1 // pred_fallthru
      _
    %s73 = smul.u32 0, 8
    %s74 = smul.u32 %s27, 2
    %s75 = smul.addr %s74, 8
    %s76 = scalar_lea.vmem [#allocation2], %s75
    %s77 = scalar_lea.sflag [#allocation3], %s27
    %s78 = smul.u32 8, 1
    %s79 = smul.u32 %s78, 2
    %s80 = sshll.u32 %s79, 4
    %81 = dma.done %s77, %s80
    %s82 = sld [smem:[#allocation4]]
    %v83 = vld [vmem:[%s76] sm:$0xff]
    %v84 = vld [vmem:[%s76 + $0x8] sm:$0xff]
    %s85 = sld [smem:[#allocation5]]
    %v86 = vstv %s85
    %v87 = vmul.f32 %v86, %v83
    %v88 = vadd.f32 %v87, 0.0
    %89 = vrot.lane.b32.xlu0 %v83, 127
    %v90 = vpop.permute.xlu0 %89
    %91 = vrot.lane.b32.xlu0 %v84, 127
    %v92 = vpop.permute.xlu0 %91
    %v93 = vlaneseq
    %v94 = vand.u32 %v93, 127
    %vm95 = vcmp.lt.s32.totalorder %v94, 127
    %v96 = vsel %vm95, %v90, %v92
    %s97 = sld [smem:[#allocation5 + $0x1]]
    %v98 = vstv %s97
    %v99 = vmul.f32 %v98, %v96
    %v100 = vadd.f32 %v88, %v99
    %v101 = vstv %s82
    %v102 = vadd.f32 %v100, %v101
    %103 = vst [vmem:[#allocation8] sm:$0xff] %v102
    // Predicated region
    $region30: #{tpu_custom_call.1} parent=1 // pred_check
      _
    $region31: #{tpu_custom_call.1} parent=1 // pred_check_branch
      %105 = sbr.rel (0) target = $region33
    $region32: #{tpu_custom_call.1} parent=1 // pred_region
      %s107 = ssub.s32 128, 128
      %108 = vsyncadd [#allocation6], %s107
      %s110 = sshll.u32 [#allocation8], 4
      %s111 = int_to_ptr.vmem [resolvable:$true] %s110
      %113 = dma.vmem_to_hbm [thread:$0]  %s111, 128, %s3, [#allocation6]
    $region33: #{tpu_custom_call.1} parent=1 // pred_fallthru
      _
    // Predicated region
    $region34: #{tpu_custom_call.1} parent=1 // pred_check
      _
    $region35: #{tpu_custom_call.1} parent=1 // pred_check_branch
      %115 = sbr.rel (0) target = $region37
    $region36: #{tpu_custom_call.1} parent=1 // pred_region
      %116 = dma.done [#allocation6], 128
    $region37: #{tpu_custom_call.1} parent=1 // pred_fallthru
      _
    %117 = vsyncpa [#allocation6], 1
    %118 = vsyncpa [#allocation7], 1
  %119 = vsyncmov [#allocation3]
  %s120 = vpop.sfrf %119
  %p121 = scmp.eq.s32.totalorder %s120, 0
  %p122 = pneg %p121
  %124 = shalt.err (%p122)
  %s125 = scalar_lea.sflag [#allocation3], 1
  %126 = vsyncmov %s125
  %s127 = vpop.sfrf %126
  %p128 = scmp.eq.s32.totalorder %s127, 0
  %p129 = pneg %p128
  %131 = shalt.err (%p129)

</llo_original>
